<compile_context>
chip_gen: v7x
topology: tpu7x:2x2x1
jax: 0.10.0
libtpu: 0.0.40
codegen_flags: <defaults>
</compile_context>

<pallas_src>
import jax
import jax.numpy as jnp
from jax.experimental import pallas as pl
from jax.experimental.pallas import tpu as pltpu


def _round_up(x, m):
    return ((x + m - 1) // m) * m


def encoder_kernel(obs_ref, acs_ref,
                   w0o_ref, w0a_ref, b0_ref,
                   w1_ref, b1_ref,
                   w2_ref, b2_ref,
                   o_ref):
    # --- fc0 with fused input concat, + ReLU --------------------------------
    # cat([obs, acs], dim=1) @ W0  ==  obs @ W0[:obs_dim] + acs @ W0[obs_dim:]
    h = jnp.dot(obs_ref[...], w0o_ref[...], preferred_element_type=jnp.float32)
    h = h + jnp.dot(acs_ref[...], w0a_ref[...], preferred_element_type=jnp.float32)
    h = h + b0_ref[...]
    h = jnp.maximum(h, 0.0)

    # --- fc1 + ReLU (bf16 matmul inputs, f32 accumulation) ------------------
    h = jnp.dot(h.astype(w1_ref.dtype), w1_ref[...],
                preferred_element_type=jnp.float32)
    h = h + b1_ref[...]
    h = jnp.maximum(h, 0.0)

    # --- fc2 (head projection) ----------------------------------------------
    logits = jnp.dot(h.astype(w2_ref.dtype), w2_ref[...],
                     preferred_element_type=jnp.float32)
    logits = logits + b2_ref[...]

    # --- softmax over the feature (last) axis == torch nn.Softmax() on 2-D ---
    m = jnp.max(logits, axis=-1, keepdims=True)
    e = jnp.exp(logits - m)
    denom = jnp.sum(e, axis=-1, keepdims=True)
    o_ref[...] = (e * pl.reciprocal(denom, approx=True)).astype(o_ref.dtype)


def encoder_forward(obs, acs, params, *, tile_b=1024):
    """obs: [B, obs_dim], acs: [B, acs_dim]; returns softmax head probs [B, head_num]."""
    w0, b0, w1, b1, w2, b2 = params
    B, obs_dim = obs.shape
    acs_dim = acs.shape[1]
    hidden = w1.shape[0]
    head_num = w2.shape[1]

    cd = jnp.bfloat16  # matmul-input dtype (halves DMA; f32 accumulation on MXU)
    obs_c = obs.astype(cd)
    acs_c = acs.astype(cd)
    # Split W0 at trace time so the concat folds into two MXU contributions.
    w0o = w0[:obs_dim].astype(cd)
    w0a = w0[obs_dim:].astype(cd)
    w1_c = w1.astype(cd)
    w2_c = w2.astype(cd)
    b0_c = b0.astype(jnp.float32)
    b1_c = b1.astype(jnp.float32)
    b2_c = b2.astype(jnp.float32)

    # Batch tiling: activations stream through the grid (auto double-buffered),
    # weights/biases stay resident (constant block index).
    tb = min(tile_b, _round_up(B, 8))
    grid = (pl.cdiv(B, tb),)

    batch_map = lambda i: (i, 0)
    resident = lambda i: (0, 0)

    in_specs = [
        pl.BlockSpec((tb, obs_dim), batch_map),        # obs
        pl.BlockSpec((tb, acs_dim), batch_map),        # acs
        pl.BlockSpec((obs_dim, hidden), resident),     # w0[:obs_dim]
        pl.BlockSpec((acs_dim, hidden), resident),     # w0[obs_dim:]
        pl.BlockSpec((1, hidden), resident),           # b0
        pl.BlockSpec((hidden, hidden), resident),      # w1
        pl.BlockSpec((1, hidden), resident),           # b1
        pl.BlockSpec((hidden, head_num), resident),    # w2
        pl.BlockSpec((1, head_num), resident),         # b2
    ]
    out_spec = pl.BlockSpec((tb, head_num), batch_map)

    return pl.pallas_call(
        encoder_kernel,
        out_shape=jax.ShapeDtypeStruct((B, head_num), jnp.float32),
        grid=grid,
        in_specs=in_specs,
        out_specs=out_spec,
        compiler_params=pltpu.CompilerParams(
            dimension_semantics=("parallel",)),  # lets v7x shard batch tiles over both TCs
    )(obs_c, acs_c, w0o, w0a, b0_c, w1_c, b1_c, w2_c, b2_c)


def init_params(key, in_dim, hidden, head_num):
    """Deterministic synthetic init (stand-in for init.basic_init)."""
    k0, k1, k2, k3, k4, k5 = jax.random.split(key, 6)
    scale = 0.1
    w0 = scale * jax.random.normal(k0, (in_dim, hidden), dtype=jnp.float32)
    b0 = scale * jax.random.normal(k1, (1, hidden), dtype=jnp.float32)
    w1 = scale * jax.random.normal(k2, (hidden, hidden), dtype=jnp.float32)
    b1 = scale * jax.random.normal(k3, (1, hidden), dtype=jnp.float32)
    w2 = scale * jax.random.normal(k4, (hidden, head_num), dtype=jnp.float32)
    b2 = scale * jax.random.normal(k5, (1, head_num), dtype=jnp.float32)
    return (w0, b0, w1, b1, w2, b2)


def encoder_reference(obs, acs, params):
    """Pure-JAX reference with the same mixed-precision recipe (bf16 in, f32 accum)."""
    w0, b0, w1, b1, w2, b2 = params
    cd = jnp.bfloat16
    x = jnp.concatenate([obs, acs], axis=1).astype(cd)
    h = jnp.dot(x, w0.astype(cd), preferred_element_type=jnp.float32) + b0
    h = jnp.maximum(h, 0.0)
    h = jnp.dot(h.astype(cd), w1.astype(cd), preferred_element_type=jnp.float32) + b1
    h = jnp.maximum(h, 0.0)
    logits = jnp.dot(h.astype(cd), w2.astype(cd), preferred_element_type=jnp.float32) + b2
    return jax.nn.softmax(logits, axis=-1)


if __name__ == "__main__":
    # Small shapes consistent with the module's forward:
    #   obs_dim (input_shape) = 12, acs_dim (output_shape) = 4,
    #   hidden_shape = 32, head_num = 8, batch = 8.
    batch, obs_dim, acs_dim, hidden, head_num = 8, 12, 4, 32, 8

    key = jax.random.PRNGKey(0)
    k_obs, k_acs, k_params = jax.random.split(key, 3)
    obs = jax.random.normal(k_obs, (batch, obs_dim), dtype=jnp.float32)
    acs = jax.random.normal(k_acs, (batch, acs_dim), dtype=jnp.float32)
    params = init_params(k_params, obs_dim + acs_dim, hidden, head_num)

    out = encoder_forward(obs, acs, params)
    out = jax.block_until_ready(out)

    ref = encoder_reference(obs, acs, params)
    assert out.shape == (batch, head_num)
    # approx reciprocal (~1e-4 rel) + bf16 matmul inputs -> modest tolerance.
    assert jnp.allclose(out, ref, atol=5e-3, rtol=5e-3), "mismatch vs JAX reference"
    assert jnp.allclose(jnp.sum(out, axis=-1), 1.0, atol=5e-3), "softmax rows must sum to ~1"

    print("KERNEL_OK")
</pallas_src>

<mosaic_0001>
module attributes {stable_mosaic.version = 11 : i64} {
  func.func @encoder_kernel(%arg0: i32, %arg1: memref<8x12xbf16, #tpu.memory_space<vmem>>, %arg2: memref<8x4xbf16, #tpu.memory_space<vmem>>, %arg3: memref<12x32xbf16, #tpu.memory_space<vmem>>, %arg4: memref<4x32xbf16, #tpu.memory_space<vmem>>, %arg5: memref<1x32xf32, #tpu.memory_space<vmem>>, %arg6: memref<32x32xbf16, #tpu.memory_space<vmem>>, %arg7: memref<1x32xf32, #tpu.memory_space<vmem>>, %arg8: memref<32x8xbf16, #tpu.memory_space<vmem>>, %arg9: memref<1x8xf32, #tpu.memory_space<vmem>>, %arg10: memref<8x8xf32, #tpu.memory_space<vmem>>) attributes {dimension_semantics = [#tpu.dimension_semantics<parallel>], iteration_bounds = array<i64: 1>, scalar_prefetch = 0 : i64, scratch_operands = 0 : i64, tpu.core_type = #tpu.core_type<tc>, window_params = [{transform_indices = @transform_0, window_bounds = array<i64: 8, 12>}, {transform_indices = @transform_1, window_bounds = array<i64: 8, 4>}, {pipeline_mode = #tpu.pipeline_mode<synchronous>, transform_indices = @transform_2, window_bounds = array<i64: 12, 32>}, {pipeline_mode = #tpu.pipeline_mode<synchronous>, transform_indices = @transform_3, window_bounds = array<i64: 4, 32>}, {pipeline_mode = #tpu.pipeline_mode<synchronous>, transform_indices = @transform_4, window_bounds = array<i64: 1, 32>}, {pipeline_mode = #tpu.pipeline_mode<synchronous>, transform_indices = @transform_5, window_bounds = array<i64: 32, 32>}, {pipeline_mode = #tpu.pipeline_mode<synchronous>, transform_indices = @transform_6, window_bounds = array<i64: 1, 32>}, {pipeline_mode = #tpu.pipeline_mode<synchronous>, transform_indices = @transform_7, window_bounds = array<i64: 32, 8>}, {pipeline_mode = #tpu.pipeline_mode<synchronous>, transform_indices = @transform_8, window_bounds = array<i64: 1, 8>}, {transform_indices = @transform_9, window_bounds = array<i64: 8, 8>}]} {
    %c0 = arith.constant 0 : index
    %c0_0 = arith.constant 0 : index
    %0 = vector.load %arg1[%c0, %c0_0] : memref<8x12xbf16, #tpu.memory_space<vmem>>, vector<8x12xbf16>
    %c0_1 = arith.constant 0 : index
    %c0_2 = arith.constant 0 : index
    %1 = vector.load %arg3[%c0_1, %c0_2] : memref<12x32xbf16, #tpu.memory_space<vmem>>, vector<12x32xbf16>
    %cst = arith.constant dense<0.000000e+00> : vector<8x32xf32>
    %2 = tpu.matmul %0, %1, %cst {dimension_numbers = #tpu.dot_dimension_numbers<[1], [0], [0], [1], [0, 0, 1, 1], [], []>} : vector<8x12xbf16>, vector<12x32xbf16>, vector<8x32xf32> -> vector<8x32xf32>
    %c0_3 = arith.constant 0 : index
    %c0_4 = arith.constant 0 : index
    %3 = vector.load %arg2[%c0_3, %c0_4] : memref<8x4xbf16, #tpu.memory_space<vmem>>, vector<8x4xbf16>
    %c0_5 = arith.constant 0 : index
    %c0_6 = arith.constant 0 : index
    %4 = vector.load %arg4[%c0_5, %c0_6] : memref<4x32xbf16, #tpu.memory_space<vmem>>, vector<4x32xbf16>
    %cst_7 = arith.constant dense<0.000000e+00> : vector<8x32xf32>
    %5 = tpu.matmul %3, %4, %cst_7 {dimension_numbers = #tpu.dot_dimension_numbers<[1], [0], [0], [1], [0, 0, 1, 1], [], []>} : vector<8x4xbf16>, vector<4x32xbf16>, vector<8x32xf32> -> vector<8x32xf32>
    %6 = arith.addf %2, %5 : vector<8x32xf32>
    %c0_8 = arith.constant 0 : index
    %c0_9 = arith.constant 0 : index
    %7 = vector.load %arg5[%c0_8, %c0_9] : memref<1x32xf32, #tpu.memory_space<vmem>>, vector<1x32xf32>
    %8 = vector.broadcast %7 : vector<1x32xf32> to vector<8x32xf32>
    %9 = arith.addf %6, %8 : vector<8x32xf32>
    %cst_10 = arith.constant 0.000000e+00 : f32
    %10 = vector.broadcast %cst_10 : f32 to vector<8x32xf32>
    %11 = arith.maximumf %9, %10 : vector<8x32xf32>
    %12 = arith.truncf %11 : vector<8x32xf32> to vector<8x32xbf16>
    %c0_11 = arith.constant 0 : index
    %c0_12 = arith.constant 0 : index
    %13 = vector.load %arg6[%c0_11, %c0_12] : memref<32x32xbf16, #tpu.memory_space<vmem>>, vector<32x32xbf16>
    %cst_13 = arith.constant dense<0.000000e+00> : vector<8x32xf32>
    %14 = tpu.matmul %12, %13, %cst_13 {dimension_numbers = #tpu.dot_dimension_numbers<[1], [0], [0], [1], [0, 0, 1, 1], [], []>} : vector<8x32xbf16>, vector<32x32xbf16>, vector<8x32xf32> -> vector<8x32xf32>
    %c0_14 = arith.constant 0 : index
    %c0_15 = arith.constant 0 : index
    %15 = vector.load %arg7[%c0_14, %c0_15] : memref<1x32xf32, #tpu.memory_space<vmem>>, vector<1x32xf32>
    %16 = vector.broadcast %15 : vector<1x32xf32> to vector<8x32xf32>
    %17 = arith.addf %14, %16 : vector<8x32xf32>
    %cst_16 = arith.constant 0.000000e+00 : f32
    %18 = vector.broadcast %cst_16 : f32 to vector<8x32xf32>
    %19 = arith.maximumf %17, %18 : vector<8x32xf32>
    %20 = arith.truncf %19 : vector<8x32xf32> to vector<8x32xbf16>
    %c0_17 = arith.constant 0 : index
    %c0_18 = arith.constant 0 : index
    %21 = vector.load %arg8[%c0_17, %c0_18] : memref<32x8xbf16, #tpu.memory_space<vmem>>, vector<32x8xbf16>
    %cst_19 = arith.constant dense<0.000000e+00> : vector<8x8xf32>
    %22 = tpu.matmul %20, %21, %cst_19 {dimension_numbers = #tpu.dot_dimension_numbers<[1], [0], [0], [1], [0, 0, 1, 1], [], []>} : vector<8x32xbf16>, vector<32x8xbf16>, vector<8x8xf32> -> vector<8x8xf32>
    %c0_20 = arith.constant 0 : index
    %c0_21 = arith.constant 0 : index
    %23 = vector.load %arg9[%c0_20, %c0_21] : memref<1x8xf32, #tpu.memory_space<vmem>>, vector<1x8xf32>
    %24 = vector.broadcast %23 : vector<1x8xf32> to vector<8x8xf32>
    %25 = arith.addf %22, %24 : vector<8x8xf32>
    %cst_22 = arith.constant dense<0xFF800000> : vector<8xf32>
    %26 = vector.multi_reduction <maximumf>, %25, %cst_22 [1] : vector<8x8xf32> to vector<8xf32>
    %27 = vector.shape_cast %26 : vector<8xf32> to vector<8x1xf32>
    %28 = vector.broadcast %27 : vector<8x1xf32> to vector<8x8xf32>
    %29 = arith.subf %25, %28 : vector<8x8xf32>
    %30 = math.exp %29 : vector<8x8xf32>
    %cst_23 = arith.constant dense<0.000000e+00> : vector<8xf32>
    %31 = vector.multi_reduction <add>, %30, %cst_23 [1] : vector<8x8xf32> to vector<8xf32>
    %32 = vector.shape_cast %31 : vector<8xf32> to vector<8x1xf32>
    %33 = tpu.reciprocal %32 {approx = true} : vector<8x1xf32> -> vector<8x1xf32>
    %34 = vector.broadcast %33 : vector<8x1xf32> to vector<8x8xf32>
    %35 = arith.mulf %30, %34 : vector<8x8xf32>
    %c0_24 = arith.constant 0 : index
    %c0_25 = arith.constant 0 : index
    %36 = vector.load %arg10[%c0_24, %c0_25] : memref<8x8xf32, #tpu.memory_space<vmem>>, vector<8x8xf32>
    tpu.vector_store %arg10[%c0_24, %c0_25], %35 {strides = array<i32>} : memref<8x8xf32, #tpu.memory_space<vmem>>, vector<8x8xf32>,
    return
  }
  func.func @transform_0(%arg0: i32) -> (i32, i32) {
    %c0_i32 = arith.constant 0 : i32
    %c0_i32_0 = arith.constant 0 : i32
    return %arg0, %c0_i32 : i32, i32
  }
  func.func @transform_1(%arg0: i32) -> (i32, i32) {
    %c0_i32 = arith.constant 0 : i32
    %c0_i32_0 = arith.constant 0 : i32
    return %arg0, %c0_i32 : i32, i32
  }
  func.func @transform_2(%arg0: i32) -> (i32, i32) {
    %c0_i32 = arith.constant 0 : i32
    %c0_i32_0 = arith.constant 0 : i32
    %c0_i32_1 = arith.constant 0 : i32
    return %c0_i32, %c0_i32_0 : i32, i32
  }
  func.func @transform_3(%arg0: i32) -> (i32, i32) {
    %c0_i32 = arith.constant 0 : i32
    %c0_i32_0 = arith.constant 0 : i32
    %c0_i32_1 = arith.constant 0 : i32
    return %c0_i32, %c0_i32_0 : i32, i32
  }
  func.func @transform_4(%arg0: i32) -> (i32, i32) {
    %c0_i32 = arith.constant 0 : i32
    %c0_i32_0 = arith.constant 0 : i32
    %c0_i32_1 = arith.constant 0 : i32
    return %c0_i32, %c0_i32_0 : i32, i32
  }
  func.func @transform_5(%arg0: i32) -> (i32, i32) {
    %c0_i32 = arith.constant 0 : i32
    %c0_i32_0 = arith.constant 0 : i32
    %c0_i32_1 = arith.constant 0 : i32
    return %c0_i32, %c0_i32_0 : i32, i32
  }
  func.func @transform_6(%arg0: i32) -> (i32, i32) {
    %c0_i32 = arith.constant 0 : i32
    %c0_i32_0 = arith.constant 0 : i32
    %c0_i32_1 = arith.constant 0 : i32
    return %c0_i32, %c0_i32_0 : i32, i32
  }
  func.func @transform_7(%arg0: i32) -> (i32, i32) {
    %c0_i32 = arith.constant 0 : i32
    %c0_i32_0 = arith.constant 0 : i32
    %c0_i32_1 = arith.constant 0 : i32
    return %c0_i32, %c0_i32_0 : i32, i32
  }
  func.func @transform_8(%arg0: i32) -> (i32, i32) {
    %c0_i32 = arith.constant 0 : i32
    %c0_i32_0 = arith.constant 0 : i32
    %c0_i32_1 = arith.constant 0 : i32
    return %c0_i32, %c0_i32_0 : i32, i32
  }
  func.func @transform_9(%arg0: i32) -> (i32, i32) {
    %c0_i32 = arith.constant 0 : i32
    %c0_i32_0 = arith.constant 0 : i32
    return %arg0, %c0_i32 : i32, i32
  }
}

</mosaic_0001>

<llo_original>
// kernel: tpu_custom_call.1
$region0: #{tpu_custom_call.1}
  #allocation0 [shape = 'u32[]', space=smem, size = 0x4, offset = 0x4, fixed_abs, tag = 'smem constant byte address 0x4 - core index']
  #allocation1 [shape = 'u32[144,128]{1,0:T(1,128)}', space=vmem, size = 0x12000, scoped, tag = 'internal scratch']
  %s0 = inlined_call_operand.vmem [shape: bf16[8,12], index: 0, kind: input, shape index: {}]
  %s1 = inlined_call_operand.vmem [shape: bf16[8,4], index: 1, kind: input, shape index: {}]
  %s2 = inlined_call_operand.vmem [shape: bf16[12,32], index: 2, kind: input, shape index: {}]
  %s3 = inlined_call_operand.vmem [shape: bf16[4,32], index: 3, kind: input, shape index: {}]
  %s4 = inlined_call_operand.vmem [shape: f32[1,32], index: 4, kind: input, shape index: {}]
  %s5 = inlined_call_operand.vmem [shape: bf16[32,32], index: 5, kind: input, shape index: {}]
  %s6 = inlined_call_operand.vmem [shape: f32[1,32], index: 6, kind: input, shape index: {}]
  %s7 = inlined_call_operand.vmem [shape: bf16[32,8], index: 7, kind: input, shape index: {}]
  %s8 = inlined_call_operand.vmem [shape: f32[1,8], index: 8, kind: input, shape index: {}]
  %s9 = inlined_call_operand.hbm [shape: f32[8,8], index: 9, kind: output, shape index: {}]
  %s10 = sld [smem:[#allocation0]]
  $region46: #{tpu_custom_call.1} parent=0
    _
  %s12 = ssub.s32 1, %s10
  %s13 = scalar_select 0, %s12, %s10
  $region1: #{tpu_custom_call.1} parent=0
    #allocation2 [shape = 'u8[4096]{0}', space=vmem, size = 0x1000, scoped, tag = 'output window, operand 0, single buffered']
    #allocation3 [shape = 's32[1]{0}', space=sflag, size = 0x4, scoped, tag = 'scoped memory for tpu_custom_call.1']
    %14 = vsyncpa [#allocation3], 0
    // Predicated region
    $region2: #{tpu_custom_call.1} parent=1 // pred_check
      _
    $region3: #{tpu_custom_call.1} parent=1 // pred_check_branch
      %16 = sbr.rel (0) target = $region5
    $region4: #{tpu_custom_call.1} parent=1 // pred_region
      _
    $region5: #{tpu_custom_call.1} parent=1 // pred_fallthru
      _
    // Predicated region
    $region6: #{tpu_custom_call.1} parent=1 // pred_check
      _
    $region7: #{tpu_custom_call.1} parent=1 // pred_check_branch
      %18 = sbr.rel (0) target = $region9
    $region8: #{tpu_custom_call.1} parent=1 // pred_region
      _
    $region9: #{tpu_custom_call.1} parent=1 // pred_fallthru
      _
    // Predicated region
    $region10: #{tpu_custom_call.1} parent=1 // pred_check
      _
    $region11: #{tpu_custom_call.1} parent=1 // pred_check_branch
      %20 = sbr.rel (0) target = $region13
    $region12: #{tpu_custom_call.1} parent=1 // pred_region
      _
    $region13: #{tpu_custom_call.1} parent=1 // pred_fallthru
      _
    // Predicated region
    $region14: #{tpu_custom_call.1} parent=1 // pred_check
      _
    $region15: #{tpu_custom_call.1} parent=1 // pred_check_branch
      %22 = sbr.rel (0) target = $region17
    $region16: #{tpu_custom_call.1} parent=1 // pred_region
      _
    $region17: #{tpu_custom_call.1} parent=1 // pred_fallthru
      _
    // Predicated region
    $region18: #{tpu_custom_call.1} parent=1 // pred_check
      _
    $region19: #{tpu_custom_call.1} parent=1 // pred_check_branch
      %24 = sbr.rel (0) target = $region21
    $region20: #{tpu_custom_call.1} parent=1 // pred_region
      _
    $region21: #{tpu_custom_call.1} parent=1 // pred_fallthru
      _
    // Predicated region
    $region22: #{tpu_custom_call.1} parent=1 // pred_check
      _
    $region23: #{tpu_custom_call.1} parent=1 // pred_check_branch
      %26 = sbr.rel (0) target = $region25
    $region24: #{tpu_custom_call.1} parent=1 // pred_region
      _
    $region25: #{tpu_custom_call.1} parent=1 // pred_fallthru
      _
    // Predicated region
    $region26: #{tpu_custom_call.1} parent=1 // pred_check
      _
    $region27: #{tpu_custom_call.1} parent=1 // pred_check_branch
      %28 = sbr.rel (0) target = $region29
    $region28: #{tpu_custom_call.1} parent=1 // pred_region
      _
    $region29: #{tpu_custom_call.1} parent=1 // pred_fallthru
      _
    // Predicated region
    $region30: #{tpu_custom_call.1} parent=1 // pred_check
      _
    $region31: #{tpu_custom_call.1} parent=1 // pred_check_branch
      %30 = sbr.rel (0) target = $region33
    $region32: #{tpu_custom_call.1} parent=1 // pred_region
      _
    $region33: #{tpu_custom_call.1} parent=1 // pred_fallthru
      _
    // Predicated region
    $region34: #{tpu_custom_call.1} parent=1 // pred_check
      _
    $region35: #{tpu_custom_call.1} parent=1 // pred_check_branch
      %32 = sbr.rel (0) target = $region37
    $region36: #{tpu_custom_call.1} parent=1 // pred_region
      _
    $region37: #{tpu_custom_call.1} parent=1 // pred_fallthru
      _
    %v34 = vld [vmem:[%s0] sm:$0xf]
    %v35 = vld [vmem:[%s2] sm:$0xf]
    %v36 = vld [vmem:[%s2 + $0x4] sm:$0x3]
    %v37 = vld [vmem:[%s1] sm:$0xf]
    %v38 = vld [vmem:[%s3] sm:$0x3]
    %vm39 = vcmask 31744
    %v41 = vsel %vm39, %v37, 0
    %vm43 = vcmask 1041408
    %v45 = vsel %vm43, %v38, 0
    %47 = vmatprep.subr.bf16.mxu0 0
    %48 = vmatpush1.bf16.msra.mxu0 %v45
    %49 = vmatprep.subr.bf16.mxu0 0
    %50 = vmatpush1.bf16.msra.mxu0 0
    %51 = vmatprep.subr.bf16.mxu0 0
    %52 = vmatpush1.bf16.msra.mxu0 0
    %53 = vmatprep.subr.bf16.mxu0 0
    %54 = vmatpush1.bf16.msra.mxu0 0
    %55 = vmatprep.subr.bf16.mxu0 0
    %56 = vmatpush1.bf16.msra.mxu0 0
    %57 = vmatprep.subr.bf16.mxu0 0
    %58 = vmatpush1.bf16.msra.mxu0 0
    %59 = vmatprep.subr.bf16.mxu0 0
    %60 = vmatpush1.bf16.msra.mxu0 0
    %61 = vmatprep.subr.bf16.mxu0 0
    %62 = vmatpush1.bf16.msra.mxu0 0
    %63 = vmatprep.subr.bf16.mxu0 0
    %64 = vmatpush1.bf16.msra.mxu0 0
    %65 = vmatprep.subr.bf16.mxu0 0
    %66 = vmatpush1.bf16.msra.mxu0 0
    %67 = vmatprep.subr.bf16.mxu0 0
    %68 = vmatpush1.bf16.msra.mxu0 0
    %69 = vmatprep.subr.bf16.mxu0 0
    %70 = vmatpush1.bf16.msra.mxu0 0
    %71 = vmatprep.subr.bf16.mxu0 0
    %72 = vmatpush1.bf16.msra.mxu0 0
    %73 = vmatprep.subr.bf16.mxu0 0
    %74 = vmatpush1.bf16.msra.mxu0 0
    %75 = vmatprep.subr.bf16.mxu0 0
    %76 = vmatpush1.bf16.msra.mxu0 0
    %77 = vmatprep.subr.bf16.mxu0 0
    %78 = vmatpush1.bf16.msra.mxu0 0
    %79 = vmatprep.mubr.bf16.mxu0 0
    %80 = vmatmul.mubr.bf16.gmra.mrb[0].mxu0 %v41
    %v81 = vpop.f32.mrb[0].mxu0
    %v82 = vadd.f32 0.0, %v81
    %v83 = vpop.f32.mrb[0].mxu0
    %v84 = vpop.f32.mrb[0].mxu0
    %v85 = vpop.f32.mrb[0].mxu0
    %86 = vdwg.mxu0
    %v89 = vunpack.c.l.b16 %v35
    %v90 = vunpack.c.l.b16 %v36
    %v91 = vpack.c.b16 %v90, %v89
    %vm92 = vcmask 97280
    %v94 = vsel %vm92, %v34, 0
    %vm96 = vcmask 1045504
    %v98 = vsel %vm96, %v91, 0
    %100 = vmatprep.subr.bf16.mxu0 0
    %101 = vmatpush1.bf16.msra.mxu0 %v98
    %102 = vmatprep.subr.bf16.mxu0 0
    %103 = vmatpush1.bf16.msra.mxu0 0
    %104 = vmatprep.subr.bf16.mxu0 0
    %105 = vmatpush1.bf16.msra.mxu0 0
    %106 = vmatprep.subr.bf16.mxu0 0
    %107 = vmatpush1.bf16.msra.mxu0 0
    %108 = vmatprep.subr.bf16.mxu0 0
    %109 = vmatpush1.bf16.msra.mxu0 0
    %110 = vmatprep.subr.bf16.mxu0 0
    %111 = vmatpush1.bf16.msra.mxu0 0
    %112 = vmatprep.subr.bf16.mxu0 0
    %113 = vmatpush1.bf16.msra.mxu0 0
    %114 = vmatprep.subr.bf16.mxu0 0
    %115 = vmatpush1.bf16.msra.mxu0 0
    %116 = vmatprep.subr.bf16.mxu0 0
    %117 = vmatpush1.bf16.msra.mxu0 0
    %118 = vmatprep.subr.bf16.mxu0 0
    %119 = vmatpush1.bf16.msra.mxu0 0
    %120 = vmatprep.subr.bf16.mxu0 0
    %121 = vmatpush1.bf16.msra.mxu0 0
    %122 = vmatprep.subr.bf16.mxu0 0
    %123 = vmatpush1.bf16.msra.mxu0 0
    %124 = vmatprep.subr.bf16.mxu0 0
    %125 = vmatpush1.bf16.msra.mxu0 0
    %126 = vmatprep.subr.bf16.mxu0 0
    %127 = vmatpush1.bf16.msra.mxu0 0
    %128 = vmatprep.subr.bf16.mxu0 0
    %129 = vmatpush1.bf16.msra.mxu0 0
    %130 = vmatprep.subr.bf16.mxu0 0
    %131 = vmatpush1.bf16.msra.mxu0 0
    %132 = vmatprep.mubr.bf16.mxu0 0
    %133 = vmatmul.mubr.bf16.gmra.mrb[0].mxu0 %v94
    %v134 = vpop.f32.mrb[0].mxu0
    %v135 = vadd.f32 %v82, %v134
    %v136 = vpop.f32.mrb[0].mxu0
    %v137 = vpop.f32.mrb[0].mxu0
    %v138 = vpop.f32.mrb[0].mxu0
    %139 = vdwg.mxu0
    %v140 = vld [vmem:[%s4] sm:$0x1]
    %v142 = vlaneseq
    %v143 = vshrl.u32 %v142, 7
    %v144 = vsub.s32 0, %v143
    %v145 = vrot.slane %v140, %v144
    %v147 = vadd.f32 %v135, %v145
    %v148 = vmax.f32 %v147, 0.0
    %v149 = vpack.c.bf16 %v148, %v148
    %v150 = vld [vmem:[%s5] sm:$0xf]
    %v151 = vld [vmem:[%s5 + $0x4] sm:$0xf]
    %v152 = vld [vmem:[%s5 + $0x8] sm:$0xf]
    %v153 = vld [vmem:[%s5 + $0xc] sm:$0xf]
    %v154 = vld [vmem:[%s6] sm:$0x1]
    %v156 = vlaneseq
    %v157 = vshrl.u32 %v156, 7
    %v158 = vsub.s32 0, %v157
    %v159 = vrot.slane %v154, %v158
    %v165 = vunpack.c.l.b16 %v150
    %v166 = vunpack.c.l.b16 %v151
    %v167 = vunpack.c.l.b16 %v152
    %v168 = vunpack.c.l.b16 %v153
    %v169 = vpack.c.b16 %v166, %v165
    %v170 = vpack.c.b16 %v168, %v167
    %vm173 = vcmask 261120
    %v175 = vsel %vm173, %v149, 0
    %177 = vmatprep.subr.bf16.mxu0 0
    %178 = vmatpush1.bf16.msra.mxu0 %v169
    %179 = vmatprep.subr.bf16.mxu0 0
    %180 = vmatpush1.bf16.msra.mxu0 %v170
    %181 = vmatprep.subr.bf16.mxu0 0
    %182 = vmatpush1.bf16.msra.mxu0 0
    %183 = vmatprep.subr.bf16.mxu0 0
    %184 = vmatpush1.bf16.msra.mxu0 0
    %185 = vmatprep.subr.bf16.mxu0 0
    %186 = vmatpush1.bf16.msra.mxu0 0
    %187 = vmatprep.subr.bf16.mxu0 0
    %188 = vmatpush1.bf16.msra.mxu0 0
    %189 = vmatprep.subr.bf16.mxu0 0
    %190 = vmatpush1.bf16.msra.mxu0 0
    %191 = vmatprep.subr.bf16.mxu0 0
    %192 = vmatpush1.bf16.msra.mxu0 0
    %193 = vmatprep.subr.bf16.mxu0 0
    %194 = vmatpush1.bf16.msra.mxu0 0
    %195 = vmatprep.subr.bf16.mxu0 0
    %196 = vmatpush1.bf16.msra.mxu0 0
    %197 = vmatprep.subr.bf16.mxu0 0
    %198 = vmatpush1.bf16.msra.mxu0 0
    %199 = vmatprep.subr.bf16.mxu0 0
    %200 = vmatpush1.bf16.msra.mxu0 0
    %201 = vmatprep.subr.bf16.mxu0 0
    %202 = vmatpush1.bf16.msra.mxu0 0
    %203 = vmatprep.subr.bf16.mxu0 0
    %204 = vmatpush1.bf16.msra.mxu0 0
    %205 = vmatprep.subr.bf16.mxu0 0
    %206 = vmatpush1.bf16.msra.mxu0 0
    %207 = vmatprep.subr.bf16.mxu0 0
    %208 = vmatpush1.bf16.msra.mxu0 0
    %209 = vmatprep.mubr.bf16.mxu0 0
    %210 = vmatmul.mubr.bf16.gmra.mrb[0].mxu0 %v175
    %v211 = vpop.f32.mrb[0].mxu0
    %v212 = vadd.f32 %v159, %v211
    %v213 = vpop.f32.mrb[0].mxu0
    %v214 = vpop.f32.mrb[0].mxu0
    %v215 = vpop.f32.mrb[0].mxu0
    %216 = vdwg.mxu0
    %v217 = vmax.f32 %v212, 0.0
    %v218 = vpack.c.bf16 %v217, %v217
    %v219 = vld [vmem:[%s7] sm:$0xf]
    %v220 = vld [vmem:[%s7 + $0x4] sm:$0xf]
    %v221 = vld [vmem:[%s7 + $0x8] sm:$0xf]
    %v222 = vld [vmem:[%s7 + $0xc] sm:$0xf]
    %v223 = vld [vmem:[%s8] sm:$0x1]
    %v225 = vlaneseq
    %v226 = vshrl.u32 %v225, 7
    %v227 = vsub.s32 0, %v226
    %v228 = vrot.slane %v223, %v227
    %v234 = vunpack.c.l.b16 %v219
    %v235 = vunpack.c.l.b16 %v220
    %v236 = vunpack.c.l.b16 %v221
    %v237 = vunpack.c.l.b16 %v222
    %v238 = vpack.c.b16 %v235, %v234
    %v239 = vpack.c.b16 %v237, %v236
    %v243 = vsel %vm173, %v218, 0
    %245 = vmatprep.subr.bf16.mxu0 0
    %246 = vmatpush1.bf16.msra.mxu0 %v238
    %247 = vmatprep.subr.bf16.mxu0 0
    %248 = vmatpush1.bf16.msra.mxu0 %v239
    %249 = vmatprep.subr.bf16.mxu0 0
    %250 = vmatpush1.bf16.msra.mxu0 0
    %251 = vmatprep.subr.bf16.mxu0 0
    %252 = vmatpush1.bf16.msra.mxu0 0
    %253 = vmatprep.subr.bf16.mxu0 0
    %254 = vmatpush1.bf16.msra.mxu0 0
    %255 = vmatprep.subr.bf16.mxu0 0
    %256 = vmatpush1.bf16.msra.mxu0 0
    %257 = vmatprep.subr.bf16.mxu0 0
    %258 = vmatpush1.bf16.msra.mxu0 0
    %259 = vmatprep.subr.bf16.mxu0 0
    %260 = vmatpush1.bf16.msra.mxu0 0
    %261 = vmatprep.subr.bf16.mxu0 0
    %262 = vmatpush1.bf16.msra.mxu0 0
    %263 = vmatprep.subr.bf16.mxu0 0
    %264 = vmatpush1.bf16.msra.mxu0 0
    %265 = vmatprep.subr.bf16.mxu0 0
    %266 = vmatpush1.bf16.msra.mxu0 0
    %267 = vmatprep.subr.bf16.mxu0 0
    %268 = vmatpush1.bf16.msra.mxu0 0
    %269 = vmatprep.subr.bf16.mxu0 0
    %270 = vmatpush1.bf16.msra.mxu0 0
    %271 = vmatprep.subr.bf16.mxu0 0
    %272 = vmatpush1.bf16.msra.mxu0 0
    %273 = vmatprep.subr.bf16.mxu0 0
    %274 = vmatpush1.bf16.msra.mxu0 0
    %275 = vmatprep.subr.bf16.mxu0 0
    %276 = vmatpush1.bf16.msra.mxu0 0
    %277 = vmatprep.mubr.bf16.mxu0 0
    %278 = vmatmul.mubr.bf16.gmra.mrb[0].mxu0 %v243
    %v279 = vpop.f32.mrb[0].mxu0
    %v280 = vadd.f32 %v228, %v279
    %v281 = vpop.f32.mrb[0].mxu0
    %v282 = vpop.f32.mrb[0].mxu0
    %v283 = vpop.f32.mrb[0].mxu0
    %284 = vdwg.mxu0
    %vm285 = vcmask 64512
    %v286 = vsel %vm285, %v280, -inf
    %287 = vmax.xlane.f32.xlu0 %v286
    %v288 = vpop.xlane.xlu0 %287
    %v289 = vsub.f32 %v280, %v288
    %v290 = vmul.f32 %v289, 1.442695
    %v291 = vpow.pop %v290
    %v292 = vsel %vm285, %v291, 0.0
    %293 = vadd.xlane.f32.xlu0 %v292
    %v294 = vpop.xlane.xlu0 %293
    %v295 = vrcp.pop %v294
    %v296 = vmul.f32 %v291, %v295
    %297 = vst.msk [vmem:[#allocation2] sm:$0xff] %vm285, %v296
    // Predicated region
    $region38: #{tpu_custom_call.1} parent=1 // pred_check
      _
    $region39: #{tpu_custom_call.1} parent=1 // pred_check_branch
      %299 = sbr.rel (0) target = $region41
    $region40: #{tpu_custom_call.1} parent=1 // pred_region
      %s301 = ssub.s32 128, 128
      %302 = vsyncadd [#allocation3], %s301
      %s304 = sshll.u32 [#allocation2], 4
      %s305 = int_to_ptr.vmem [resolvable:$true] %s304
      %307 = dma.vmem_to_hbm [thread:$0]  %s305, 128, %s9, [#allocation3]
    $region41: #{tpu_custom_call.1} parent=1 // pred_fallthru
      _
    // Predicated region
    $region42: #{tpu_custom_call.1} parent=1 // pred_check
      _
    $region43: #{tpu_custom_call.1} parent=1 // pred_check_branch
      %309 = sbr.rel (0) target = $region45
    $region44: #{tpu_custom_call.1} parent=1 // pred_region
      %310 = dma.done [#allocation3], 128
    $region45: #{tpu_custom_call.1} parent=1 // pred_fallthru
      _
    %311 = vsyncpa [#allocation3], 1

</llo_original>
